<compile_context>
chip_gen: v5e
topology: v5e:2x2
jax: 0.10.0
libtpu: 0.0.40
codegen_flags: <defaults>
</compile_context>

<pallas_src>
import functools
import math

import jax
import jax.numpy as jnp
from jax import lax
from jax.experimental import pallas as pl
from jax.experimental.pallas import tpu as pltpu


def _mha_kernel(q_ref, k_ref, v_ref, wq_ref, wk_ref, wv_ref,
                out_ref, attn_ref, *, n_heads, d_k, d_v, scale):
    # grid point = (batch b, Lq tile). k/v and the fused weights have
    # grid-invariant (or b-only) block indices, so Pallas keeps them resident
    # instead of re-DMAing them every step.
    q = q_ref[0]            # (Lq_blk, d_model)
    k = k_ref[0]            # (Lk, d_model)
    v = v_ref[0]            # (Lk, d_model)
    wq = wq_ref[...]        # (d_model, n_heads*d_k)  -- head-major columns
    wk = wk_ref[...]        # (d_model, n_heads*d_k)
    wv = wv_ref[...]        # (d_model, n_heads*d_v)

    # fused projections for all heads (wide MXU matmuls); fold 1/sqrt(d_k)
    # into the small qp tensor instead of the (Lq, Lk) score tile.
    qp = jnp.dot(q, wq, preferred_element_type=jnp.float32) * scale
    kp = jnp.dot(k, wk, preferred_element_type=jnp.float32)
    vp = jnp.dot(v, wv, preferred_element_type=jnp.float32)

    outs = []
    for h in range(n_heads):            # static unroll over heads
        qh = qp[:, h * d_k:(h + 1) * d_k]      # (Lq_blk, d_k)
        kh = kp[:, h * d_k:(h + 1) * d_k]      # (Lk, d_k)
        vh = vp[:, h * d_v:(h + 1) * d_v]      # (Lk, d_v)

        # scaled dot-product attention (attn_mask=None path); contract the
        # last dims directly -> no explicit kp.T materialization.
        s = lax.dot_general(qh, kh, (((1,), (1,)), ((), ())),
                            preferred_element_type=jnp.float32)   # (Lq_blk, Lk)
        m = jnp.max(s, axis=-1, keepdims=True)
        e = jnp.exp(s - m)
        denom = jnp.sum(e, axis=-1, keepdims=True)
        a = e / denom                                             # softmax(dim=-1)
        attn_ref[h, 0] = a.astype(attn_ref.dtype)
        outs.append(jnp.dot(a, vh, preferred_element_type=jnp.float32))

    # single lane-dense store of all heads' outputs: (Lq_blk, n_heads*d_v)
    out_ref[0] = jnp.concatenate(outs, axis=-1).astype(out_ref.dtype)


def multi_head_attention(q, k, v, w_q, w_k, w_v, *, block_lq=None):
    """Pallas forward of _MultiHeadAttention (attn_mask=None, dropout=eval)."""
    B, Lq, d_model = q.shape
    Lk = k.shape[1]
    n_heads, _, d_k = w_q.shape
    d_v = w_v.shape[2]
    scale = 1.0 / math.sqrt(d_k)

    # fused, head-major weight layout: (d_model, n_heads * d_x)
    wq_f = jnp.transpose(w_q, (1, 0, 2)).reshape(d_model, n_heads * d_k)
    wk_f = jnp.transpose(w_k, (1, 0, 2)).reshape(d_model, n_heads * d_k)
    wv_f = jnp.transpose(w_v, (1, 0, 2)).reshape(d_model, n_heads * d_v)

    # Lq tiling so the f32 (Lq_blk, Lk) score tile fits VMEM at large L;
    # for small problems the whole Lq is one tile (fewest grid steps).
    if block_lq is None:
        block_lq = 512 if (Lq > 512 and Lq % 512 == 0) else Lq
    n_lq = Lq // block_lq

    kernel = functools.partial(_mha_kernel, n_heads=n_heads,
                               d_k=d_k, d_v=d_v, scale=scale)

    out, attn = pl.pallas_call(
        kernel,
        out_shape=(
            jax.ShapeDtypeStruct((B, Lq, n_heads * d_v), jnp.float32),
            jax.ShapeDtypeStruct((n_heads, B, Lq, Lk), jnp.float32),
        ),
        grid_spec=pltpu.PrefetchScalarGridSpec(
            num_scalar_prefetch=0,
            grid=(B, n_lq),
            in_specs=[
                pl.BlockSpec((1, block_lq, d_model), lambda b, l: (b, l, 0)),   # q
                pl.BlockSpec((1, Lk, d_model), lambda b, l: (b, 0, 0)),         # k (resident over Lq tiles)
                pl.BlockSpec((1, Lk, d_model), lambda b, l: (b, 0, 0)),         # v (resident over Lq tiles)
                pl.BlockSpec((d_model, n_heads * d_k), lambda b, l: (0, 0)),    # w_q fused (resident)
                pl.BlockSpec((d_model, n_heads * d_k), lambda b, l: (0, 0)),    # w_k fused (resident)
                pl.BlockSpec((d_model, n_heads * d_v), lambda b, l: (0, 0)),    # w_v fused (resident)
            ],
            out_specs=[
                pl.BlockSpec((1, block_lq, n_heads * d_v), lambda b, l: (b, l, 0)),
                pl.BlockSpec((n_heads, 1, block_lq, Lk), lambda b, l: (0, b, l, 0)),
            ],
        ),
        compiler_params=pltpu.CompilerParams(
            dimension_semantics=("parallel", "parallel"),
            vmem_limit_bytes=64 * 1024 * 1024,
        ),
    )(q, k, v, wq_f, wk_f, wv_f)

    # match PyTorch return convention:
    #   outputs: tuple of n_heads tensors of shape (B, Lq, d_v)
    #   attn   : (n_heads * B, Lq, Lk)   (head-major along dim 0)
    outputs = tuple(out[:, :, h * d_v:(h + 1) * d_v] for h in range(n_heads))
    attn_flat = attn.reshape(n_heads * B, Lq, Lk)
    return outputs, attn_flat


def _xavier_normal(key, shape):
    # torch.nn.init.xavier_normal_ for a (n_heads, d_model, d_x) parameter:
    # fan_in = size(1) * recf, fan_out = size(0) * recf, recf = prod(dims[2:])
    n0, n1, recf = shape[0], shape[1], shape[2]
    fan_in = n1 * recf
    fan_out = n0 * recf
    std = math.sqrt(2.0 / (fan_in + fan_out))
    return std * jax.random.normal(key, shape, dtype=jnp.float32)


def _reference(q, k, v, w_q, w_k, w_v):
    # pure-JAX reference mirroring the PyTorch math
    n_heads, d_model, d_k = w_q.shape
    B, Lq, _ = q.shape
    Lk = k.shape[1]
    qp = jnp.einsum("bld,hdk->hblk", q, w_q)   # (H, B, Lq, d_k)
    kp = jnp.einsum("bld,hdk->hblk", k, w_k)
    vp = jnp.einsum("bld,hdk->hblk", v, w_v)
    s = jnp.einsum("hbqk,hbmk->hbqm", qp, kp) / math.sqrt(d_k)
    attn = jax.nn.softmax(s, axis=-1)
    out = jnp.einsum("hbqm,hbmv->hbqv", attn, vp)
    return out, attn.reshape(n_heads * B, Lq, Lk)


if __name__ == "__main__":
    # small, module-consistent shapes
    B, L, d_model = 2, 8, 32
    d_k, d_v, n_heads = 16, 16, 4

    key = jax.random.PRNGKey(0)
    kq, kk, kv, kwq, kwk, kwv = jax.random.split(key, 6)

    q = jax.random.normal(kq, (B, L, d_model), dtype=jnp.float32)
    k = jax.random.normal(kk, (B, L, d_model), dtype=jnp.float32)
    v = jax.random.normal(kv, (B, L, d_model), dtype=jnp.float32)

    w_q = _xavier_normal(kwq, (n_heads, d_model, d_k))
    w_k = _xavier_normal(kwk, (n_heads, d_model, d_k))
    w_v = _xavier_normal(kwv, (n_heads, d_model, d_v))

    outputs, attn = multi_head_attention(q, k, v, w_q, w_k, w_v)
    jax.block_until_ready(outputs)
    jax.block_until_ready(attn)

    # correctness check against pure-JAX reference
    ref_out, ref_attn = _reference(q, k, v, w_q, w_k, w_v)
    out_stacked = jnp.stack(outputs, axis=0)
    assert out_stacked.shape == (n_heads, B, L, d_v)
    assert attn.shape == (n_heads * B, L, L)
    assert jnp.allclose(out_stacked, ref_out, atol=1e-5, rtol=1e-5)
    assert jnp.allclose(attn, ref_attn, atol=1e-5, rtol=1e-5)

    print("KERNEL_OK")
</pallas_src>

<mosaic_0001>
module attributes {stable_mosaic.version = 11 : i64} {
  func.func @_mha_kernel(%arg0: i32, %arg1: i32, %arg2: memref<1x8x32xf32, #tpu.memory_space<vmem>>, %arg3: memref<1x8x32xf32, #tpu.memory_space<vmem>>, %arg4: memref<1x8x32xf32, #tpu.memory_space<vmem>>, %arg5: memref<32x64xf32, #tpu.memory_space<vmem>>, %arg6: memref<32x64xf32, #tpu.memory_space<vmem>>, %arg7: memref<32x64xf32, #tpu.memory_space<vmem>>, %arg8: memref<1x8x64xf32, #tpu.memory_space<vmem>>, %arg9: memref<4x1x8x8xf32, #tpu.memory_space<vmem>>) attributes {dimension_semantics = [#tpu.dimension_semantics<parallel>, #tpu.dimension_semantics<parallel>], iteration_bounds = array<i64: 2, 1>, scalar_prefetch = 0 : i64, scratch_operands = 0 : i64, tpu.core_type = #tpu.core_type<tc>, window_params = [{transform_indices = @transform_0, window_bounds = array<i64: 1, 8, 32>}, {transform_indices = @transform_1, window_bounds = array<i64: 1, 8, 32>}, {transform_indices = @transform_2, window_bounds = array<i64: 1, 8, 32>}, {pipeline_mode = #tpu.pipeline_mode<synchronous>, transform_indices = @transform_3, window_bounds = array<i64: 32, 64>}, {pipeline_mode = #tpu.pipeline_mode<synchronous>, transform_indices = @transform_4, window_bounds = array<i64: 32, 64>}, {pipeline_mode = #tpu.pipeline_mode<synchronous>, transform_indices = @transform_5, window_bounds = array<i64: 32, 64>}, {transform_indices = @transform_6, window_bounds = array<i64: 1, 8, 64>}, {transform_indices = @transform_7, window_bounds = array<i64: 4, 1, 8, 8>}]} {
    %c0 = arith.constant 0 : index
    %c0_0 = arith.constant 0 : index
    %c0_1 = arith.constant 0 : index
    %0 = vector.load %arg2[%c0, %c0_0, %c0_1] : memref<1x8x32xf32, #tpu.memory_space<vmem>>, vector<1x8x32xf32>
    %1 = vector.shape_cast %0 : vector<1x8x32xf32> to vector<8x32xf32>
    %c0_2 = arith.constant 0 : index
    %c0_3 = arith.constant 0 : index
    %c0_4 = arith.constant 0 : index
    %2 = vector.load %arg3[%c0_2, %c0_3, %c0_4] : memref<1x8x32xf32, #tpu.memory_space<vmem>>, vector<1x8x32xf32>
    %3 = vector.shape_cast %2 : vector<1x8x32xf32> to vector<8x32xf32>
    %c0_5 = arith.constant 0 : index
    %c0_6 = arith.constant 0 : index
    %c0_7 = arith.constant 0 : index
    %4 = vector.load %arg4[%c0_5, %c0_6, %c0_7] : memref<1x8x32xf32, #tpu.memory_space<vmem>>, vector<1x8x32xf32>
    %5 = vector.shape_cast %4 : vector<1x8x32xf32> to vector<8x32xf32>
    %c0_8 = arith.constant 0 : index
    %c0_9 = arith.constant 0 : index
    %6 = vector.load %arg5[%c0_8, %c0_9] : memref<32x64xf32, #tpu.memory_space<vmem>>, vector<32x64xf32>
    %c0_10 = arith.constant 0 : index
    %c0_11 = arith.constant 0 : index
    %7 = vector.load %arg6[%c0_10, %c0_11] : memref<32x64xf32, #tpu.memory_space<vmem>>, vector<32x64xf32>
    %c0_12 = arith.constant 0 : index
    %c0_13 = arith.constant 0 : index
    %8 = vector.load %arg7[%c0_12, %c0_13] : memref<32x64xf32, #tpu.memory_space<vmem>>, vector<32x64xf32>
    %cst = arith.constant dense<0.000000e+00> : vector<8x64xf32>
    %9 = tpu.matmul %1, %6, %cst {dimension_numbers = #tpu.dot_dimension_numbers<[1], [0], [0], [1], [0, 0, 1, 1], [], []>} : vector<8x32xf32>, vector<32x64xf32>, vector<8x64xf32> -> vector<8x64xf32>
    %cst_14 = arith.constant 2.500000e-01 : f32
    %10 = vector.broadcast %cst_14 : f32 to vector<8x64xf32>
    %11 = arith.mulf %9, %10 : vector<8x64xf32>
    %cst_15 = arith.constant dense<0.000000e+00> : vector<8x64xf32>
    %12 = tpu.matmul %3, %7, %cst_15 {dimension_numbers = #tpu.dot_dimension_numbers<[1], [0], [0], [1], [0, 0, 1, 1], [], []>} : vector<8x32xf32>, vector<32x64xf32>, vector<8x64xf32> -> vector<8x64xf32>
    %cst_16 = arith.constant dense<0.000000e+00> : vector<8x64xf32>
    %13 = tpu.matmul %5, %8, %cst_16 {dimension_numbers = #tpu.dot_dimension_numbers<[1], [0], [0], [1], [0, 0, 1, 1], [], []>} : vector<8x32xf32>, vector<32x64xf32>, vector<8x64xf32> -> vector<8x64xf32>
    %14 = vector.extract_strided_slice %11 {offsets = [0, 0], sizes = [8, 16], strides = [1, 1]} : vector<8x64xf32> to vector<8x16xf32>
    %15 = vector.extract_strided_slice %12 {offsets = [0, 0], sizes = [8, 16], strides = [1, 1]} : vector<8x64xf32> to vector<8x16xf32>
    %16 = vector.extract_strided_slice %13 {offsets = [0, 0], sizes = [8, 16], strides = [1, 1]} : vector<8x64xf32> to vector<8x16xf32>
    %cst_17 = arith.constant dense<0.000000e+00> : vector<8x8xf32>
    %17 = tpu.matmul %14, %15, %cst_17 {dimension_numbers = #tpu.dot_dimension_numbers<[1], [1], [0], [0], [0, 0, 1, 0], [], []>} : vector<8x16xf32>, vector<8x16xf32>, vector<8x8xf32> -> vector<8x8xf32>
    %cst_18 = arith.constant dense<0xFF800000> : vector<8xf32>
    %18 = vector.multi_reduction <maximumf>, %17, %cst_18 [1] : vector<8x8xf32> to vector<8xf32>
    %19 = vector.shape_cast %18 : vector<8xf32> to vector<8x1xf32>
    %20 = vector.broadcast %19 : vector<8x1xf32> to vector<8x8xf32>
    %21 = arith.subf %17, %20 : vector<8x8xf32>
    %22 = math.exp %21 : vector<8x8xf32>
    %cst_19 = arith.constant dense<0.000000e+00> : vector<8xf32>
    %23 = vector.multi_reduction <add>, %22, %cst_19 [1] : vector<8x8xf32> to vector<8xf32>
    %24 = vector.shape_cast %23 : vector<8xf32> to vector<8x1xf32>
    %25 = vector.broadcast %24 : vector<8x1xf32> to vector<8x8xf32>
    %26 = arith.divf %22, %25 : vector<8x8xf32>
    %c0_20 = arith.constant 0 : index
    %c0_21 = arith.constant 0 : index
    %c0_22 = arith.constant 0 : index
    %c0_23 = arith.constant 0 : index
    %27 = vector.load %arg9[%c0_20, %c0_21, %c0_22, %c0_23] : memref<4x1x8x8xf32, #tpu.memory_space<vmem>>, vector<1x1x8x8xf32>
    %28 = vector.shape_cast %27 : vector<1x1x8x8xf32> to vector<8x8xf32>
    %29 = vector.shape_cast %26 : vector<8x8xf32> to vector<1x1x8x8xf32>
    tpu.vector_store %arg9[%c0_20, %c0_21, %c0_22, %c0_23], %29 {strides = array<i32>} : memref<4x1x8x8xf32, #tpu.memory_space<vmem>>, vector<1x1x8x8xf32>,
    %cst_24 = arith.constant dense<0.000000e+00> : vector<8x16xf32>
    %30 = tpu.matmul %26, %16, %cst_24 {dimension_numbers = #tpu.dot_dimension_numbers<[1], [0], [0], [1], [0, 0, 1, 1], [], []>} : vector<8x8xf32>, vector<8x16xf32>, vector<8x16xf32> -> vector<8x16xf32>
    %31 = vector.extract_strided_slice %11 {offsets = [0, 16], sizes = [8, 16], strides = [1, 1]} : vector<8x64xf32> to vector<8x16xf32>
    %32 = vector.extract_strided_slice %12 {offsets = [0, 16], sizes = [8, 16], strides = [1, 1]} : vector<8x64xf32> to vector<8x16xf32>
    %33 = vector.extract_strided_slice %13 {offsets = [0, 16], sizes = [8, 16], strides = [1, 1]} : vector<8x64xf32> to vector<8x16xf32>
    %cst_25 = arith.constant dense<0.000000e+00> : vector<8x8xf32>
    %34 = tpu.matmul %31, %32, %cst_25 {dimension_numbers = #tpu.dot_dimension_numbers<[1], [1], [0], [0], [0, 0, 1, 0], [], []>} : vector<8x16xf32>, vector<8x16xf32>, vector<8x8xf32> -> vector<8x8xf32>
    %cst_26 = arith.constant dense<0xFF800000> : vector<8xf32>
    %35 = vector.multi_reduction <maximumf>, %34, %cst_26 [1] : vector<8x8xf32> to vector<8xf32>
    %36 = vector.shape_cast %35 : vector<8xf32> to vector<8x1xf32>
    %37 = vector.broadcast %36 : vector<8x1xf32> to vector<8x8xf32>
    %38 = arith.subf %34, %37 : vector<8x8xf32>
    %39 = math.exp %38 : vector<8x8xf32>
    %cst_27 = arith.constant dense<0.000000e+00> : vector<8xf32>
    %40 = vector.multi_reduction <add>, %39, %cst_27 [1] : vector<8x8xf32> to vector<8xf32>
    %41 = vector.shape_cast %40 : vector<8xf32> to vector<8x1xf32>
    %42 = vector.broadcast %41 : vector<8x1xf32> to vector<8x8xf32>
    %43 = arith.divf %39, %42 : vector<8x8xf32>
    %c1 = arith.constant 1 : index
    %c0_28 = arith.constant 0 : index
    %c0_29 = arith.constant 0 : index
    %c0_30 = arith.constant 0 : index
    %44 = vector.load %arg9[%c1, %c0_28, %c0_29, %c0_30] : memref<4x1x8x8xf32, #tpu.memory_space<vmem>>, vector<1x1x8x8xf32>
    %45 = vector.shape_cast %44 : vector<1x1x8x8xf32> to vector<8x8xf32>
    %46 = vector.shape_cast %43 : vector<8x8xf32> to vector<1x1x8x8xf32>
    tpu.vector_store %arg9[%c1, %c0_28, %c0_29, %c0_30], %46 {strides = array<i32>} : memref<4x1x8x8xf32, #tpu.memory_space<vmem>>, vector<1x1x8x8xf32>,
    %cst_31 = arith.constant dense<0.000000e+00> : vector<8x16xf32>
    %47 = tpu.matmul %43, %33, %cst_31 {dimension_numbers = #tpu.dot_dimension_numbers<[1], [0], [0], [1], [0, 0, 1, 1], [], []>} : vector<8x8xf32>, vector<8x16xf32>, vector<8x16xf32> -> vector<8x16xf32>
    %48 = vector.extract_strided_slice %11 {offsets = [0, 32], sizes = [8, 16], strides = [1, 1]} : vector<8x64xf32> to vector<8x16xf32>
    %49 = vector.extract_strided_slice %12 {offsets = [0, 32], sizes = [8, 16], strides = [1, 1]} : vector<8x64xf32> to vector<8x16xf32>
    %50 = vector.extract_strided_slice %13 {offsets = [0, 32], sizes = [8, 16], strides = [1, 1]} : vector<8x64xf32> to vector<8x16xf32>
    %cst_32 = arith.constant dense<0.000000e+00> : vector<8x8xf32>
    %51 = tpu.matmul %48, %49, %cst_32 {dimension_numbers = #tpu.dot_dimension_numbers<[1], [1], [0], [0], [0, 0, 1, 0], [], []>} : vector<8x16xf32>, vector<8x16xf32>, vector<8x8xf32> -> vector<8x8xf32>
    %cst_33 = arith.constant dense<0xFF800000> : vector<8xf32>
    %52 = vector.multi_reduction <maximumf>, %51, %cst_33 [1] : vector<8x8xf32> to vector<8xf32>
    %53 = vector.shape_cast %52 : vector<8xf32> to vector<8x1xf32>
    %54 = vector.broadcast %53 : vector<8x1xf32> to vector<8x8xf32>
    %55 = arith.subf %51, %54 : vector<8x8xf32>
    %56 = math.exp %55 : vector<8x8xf32>
    %cst_34 = arith.constant dense<0.000000e+00> : vector<8xf32>
    %57 = vector.multi_reduction <add>, %56, %cst_34 [1] : vector<8x8xf32> to vector<8xf32>
    %58 = vector.shape_cast %57 : vector<8xf32> to vector<8x1xf32>
    %59 = vector.broadcast %58 : vector<8x1xf32> to vector<8x8xf32>
    %60 = arith.divf %56, %59 : vector<8x8xf32>
    %c2 = arith.constant 2 : index
    %c0_35 = arith.constant 0 : index
    %c0_36 = arith.constant 0 : index
    %c0_37 = arith.constant 0 : index
    %61 = vector.load %arg9[%c2, %c0_35, %c0_36, %c0_37] : memref<4x1x8x8xf32, #tpu.memory_space<vmem>>, vector<1x1x8x8xf32>
    %62 = vector.shape_cast %61 : vector<1x1x8x8xf32> to vector<8x8xf32>
    %63 = vector.shape_cast %60 : vector<8x8xf32> to vector<1x1x8x8xf32>
    tpu.vector_store %arg9[%c2, %c0_35, %c0_36, %c0_37], %63 {strides = array<i32>} : memref<4x1x8x8xf32, #tpu.memory_space<vmem>>, vector<1x1x8x8xf32>,
    %cst_38 = arith.constant dense<0.000000e+00> : vector<8x16xf32>
    %64 = tpu.matmul %60, %50, %cst_38 {dimension_numbers = #tpu.dot_dimension_numbers<[1], [0], [0], [1], [0, 0, 1, 1], [], []>} : vector<8x8xf32>, vector<8x16xf32>, vector<8x16xf32> -> vector<8x16xf32>
    %65 = vector.extract_strided_slice %11 {offsets = [0, 48], sizes = [8, 16], strides = [1, 1]} : vector<8x64xf32> to vector<8x16xf32>
    %66 = vector.extract_strided_slice %12 {offsets = [0, 48], sizes = [8, 16], strides = [1, 1]} : vector<8x64xf32> to vector<8x16xf32>
    %67 = vector.extract_strided_slice %13 {offsets = [0, 48], sizes = [8, 16], strides = [1, 1]} : vector<8x64xf32> to vector<8x16xf32>
    %cst_39 = arith.constant dense<0.000000e+00> : vector<8x8xf32>
    %68 = tpu.matmul %65, %66, %cst_39 {dimension_numbers = #tpu.dot_dimension_numbers<[1], [1], [0], [0], [0, 0, 1, 0], [], []>} : vector<8x16xf32>, vector<8x16xf32>, vector<8x8xf32> -> vector<8x8xf32>
    %cst_40 = arith.constant dense<0xFF800000> : vector<8xf32>
    %69 = vector.multi_reduction <maximumf>, %68, %cst_40 [1] : vector<8x8xf32> to vector<8xf32>
    %70 = vector.shape_cast %69 : vector<8xf32> to vector<8x1xf32>
    %71 = vector.broadcast %70 : vector<8x1xf32> to vector<8x8xf32>
    %72 = arith.subf %68, %71 : vector<8x8xf32>
    %73 = math.exp %72 : vector<8x8xf32>
    %cst_41 = arith.constant dense<0.000000e+00> : vector<8xf32>
    %74 = vector.multi_reduction <add>, %73, %cst_41 [1] : vector<8x8xf32> to vector<8xf32>
    %75 = vector.shape_cast %74 : vector<8xf32> to vector<8x1xf32>
    %76 = vector.broadcast %75 : vector<8x1xf32> to vector<8x8xf32>
    %77 = arith.divf %73, %76 : vector<8x8xf32>
    %c3 = arith.constant 3 : index
    %c0_42 = arith.constant 0 : index
    %c0_43 = arith.constant 0 : index
    %c0_44 = arith.constant 0 : index
    %78 = vector.load %arg9[%c3, %c0_42, %c0_43, %c0_44] : memref<4x1x8x8xf32, #tpu.memory_space<vmem>>, vector<1x1x8x8xf32>
    %79 = vector.shape_cast %78 : vector<1x1x8x8xf32> to vector<8x8xf32>
    %80 = vector.shape_cast %77 : vector<8x8xf32> to vector<1x1x8x8xf32>
    tpu.vector_store %arg9[%c3, %c0_42, %c0_43, %c0_44], %80 {strides = array<i32>} : memref<4x1x8x8xf32, #tpu.memory_space<vmem>>, vector<1x1x8x8xf32>,
    %cst_45 = arith.constant dense<0.000000e+00> : vector<8x16xf32>
    %81 = tpu.matmul %77, %67, %cst_45 {dimension_numbers = #tpu.dot_dimension_numbers<[1], [0], [0], [1], [0, 0, 1, 1], [], []>} : vector<8x8xf32>, vector<8x16xf32>, vector<8x16xf32> -> vector<8x16xf32>
    %82 = tpu.concatenate %30, %47, %64, %81 in 1 : vector<8x16xf32>, vector<8x16xf32>, vector<8x16xf32>, vector<8x16xf32> -> vector<8x64xf32>
    %c0_46 = arith.constant 0 : index
    %c0_47 = arith.constant 0 : index
    %c0_48 = arith.constant 0 : index
    %83 = vector.load %arg8[%c0_46, %c0_47, %c0_48] : memref<1x8x64xf32, #tpu.memory_space<vmem>>, vector<1x8x64xf32>
    %84 = vector.shape_cast %83 : vector<1x8x64xf32> to vector<8x64xf32>
    %85 = vector.shape_cast %82 : vector<8x64xf32> to vector<1x8x64xf32>
    tpu.vector_store %arg8[%c0_46, %c0_47, %c0_48], %85 {strides = array<i32>} : memref<1x8x64xf32, #tpu.memory_space<vmem>>, vector<1x8x64xf32>,
    return
  }
  func.func @transform_0(%arg0: i32, %arg1: i32) -> (i32, i32, i32) {
    %c0_i32 = arith.constant 0 : i32
    %c0_i32_0 = arith.constant 0 : i32
    return %arg0, %arg1, %c0_i32 : i32, i32, i32
  }
  func.func @transform_1(%arg0: i32, %arg1: i32) -> (i32, i32, i32) {
    %c0_i32 = arith.constant 0 : i32
    %c0_i32_0 = arith.constant 0 : i32
    %c0_i32_1 = arith.constant 0 : i32
    return %arg0, %c0_i32, %c0_i32_0 : i32, i32, i32
  }
  func.func @transform_2(%arg0: i32, %arg1: i32) -> (i32, i32, i32) {
    %c0_i32 = arith.constant 0 : i32
    %c0_i32_0 = arith.constant 0 : i32
    %c0_i32_1 = arith.constant 0 : i32
    return %arg0, %c0_i32, %c0_i32_0 : i32, i32, i32
  }
  func.func @transform_3(%arg0: i32, %arg1: i32) -> (i32, i32) {
    %c0_i32 = arith.constant 0 : i32
    %c0_i32_0 = arith.constant 0 : i32
    %c0_i32_1 = arith.constant 0 : i32
    return %c0_i32, %c0_i32_0 : i32, i32
  }
  func.func @transform_4(%arg0: i32, %arg1: i32) -> (i32, i32) {
    %c0_i32 = arith.constant 0 : i32
    %c0_i32_0 = arith.constant 0 : i32
    %c0_i32_1 = arith.constant 0 : i32
    return %c0_i32, %c0_i32_0 : i32, i32
  }
  func.func @transform_5(%arg0: i32, %arg1: i32) -> (i32, i32) {
    %c0_i32 = arith.constant 0 : i32
    %c0_i32_0 = arith.constant 0 : i32
    %c0_i32_1 = arith.constant 0 : i32
    return %c0_i32, %c0_i32_0 : i32, i32
  }
  func.func @transform_6(%arg0: i32, %arg1: i32) -> (i32, i32, i32) {
    %c0_i32 = arith.constant 0 : i32
    %c0_i32_0 = arith.constant 0 : i32
    return %arg0, %arg1, %c0_i32 : i32, i32, i32
  }
  func.func @transform_7(%arg0: i32, %arg1: i32) -> (i32, i32, i32, i32) {
    %c0_i32 = arith.constant 0 : i32
    %c0_i32_0 = arith.constant 0 : i32
    %c0_i32_1 = arith.constant 0 : i32
    return %c0_i32, %arg0, %arg1, %c0_i32_0 : i32, i32, i32, i32
  }
}

</mosaic_0001>

<llo_original>
// kernel: tpu_custom_call.1
$region0: #{tpu_custom_call.1}
  #allocation0 [shape = 'u32[]', space=smem, size = 0x4, offset = 0x4, fixed_abs, tag = 'smem constant byte address 0x4 - core index']
  #allocation1 [shape = 'u32[72,128]{1,0:T(1,128)}', space=vmem, size = 0x9000, scoped, tag = 'internal scratch']
  %s0 = inlined_call_operand.hbm [shape: f32[2,8,32], index: 0, kind: input, shape index: {}]
  %s1 = inlined_call_operand.hbm [shape: f32[2,8,32], index: 1, kind: input, shape index: {}]
  %s2 = inlined_call_operand.hbm [shape: f32[2,8,32], index: 2, kind: input, shape index: {}]
  %s3 = inlined_call_operand.hbm [shape: f32[32,64], index: 3, kind: input, shape index: {}]
  %s4 = inlined_call_operand.hbm [shape: f32[32,64], index: 4, kind: input, shape index: {}]
  %s5 = inlined_call_operand.hbm [shape: f32[32,64], index: 5, kind: input, shape index: {}]
  %s6 = inlined_call_operand.hbm [shape: f32[2,8,64], index: 6, kind: output, shape index: {0}]
  %s7 = inlined_call_operand.hbm [shape: f32[4,2,8,8], index: 7, kind: output, shape index: {1}]
  %8 = xla_tuple %s6, %s7
  %s9 = sld [smem:[#allocation0]]
  $region89: #{tpu_custom_call.1} parent=0
    _
  %s11 = ssub.s32 1, %s9
  %s12 = scalar_select 0, %s11, %s9
  $region1: #{tpu_custom_call.1} parent=0
    #allocation2 [shape = 'u8[8192]{0}', space=vmem, size = 0x2000, scoped, tag = 'input window, operand 0']
    #allocation3 [shape = 's32[2]{0}', space=sflag, size = 0x8, scoped, tag = 'scoped memory for tpu_custom_call.1']
    #allocation4 [shape = 's32[2]{0}', space=sflag, size = 0x8, scoped, tag = 'scoped memory for tpu_custom_call.1']
    #allocation5 [shape = 'u8[8192]{0}', space=vmem, size = 0x2000, scoped, tag = 'input window, operand 1']
    #allocation6 [shape = 's32[2]{0}', space=sflag, size = 0x8, scoped, tag = 'scoped memory for tpu_custom_call.1']
    #allocation7 [shape = 'u8[8192]{0}', space=vmem, size = 0x2000, scoped, tag = 'input window, operand 2']
    #allocation8 [shape = 'u8[16384]{0}', space=vmem, size = 0x4000, scoped, tag = 'input window, operand 3, single buffered']
    #allocation9 [shape = 's32[1]{0}', space=sflag, size = 0x4, scoped, tag = 'scoped memory for tpu_custom_call.1']
    #allocation10 [shape = 'u8[16384]{0}', space=vmem, size = 0x4000, scoped, tag = 'input window, operand 4, single buffered']
    #allocation11 [shape = 'u8[16384]{0}', space=vmem, size = 0x4000, scoped, tag = 'input window, operand 5, single buffered']
    #allocation12 [shape = 's32[1]{0}', space=sflag, size = 0x4, scoped, tag = 'scoped memory for tpu_custom_call.1']
    #allocation13 [shape = 'u8[8192]{0}', space=vmem, size = 0x2000, scoped, tag = 'output window, operand 0']
    #allocation14 [shape = 'u8[32768]{0}', space=vmem, size = 0x8000, scoped, tag = 'output window, operand 1']
    #allocation15 [shape = 's32[2]{0}', space=sflag, size = 0x8, scoped, tag = 'scoped memory for tpu_custom_call.1']
    %13 = vsyncpa [#allocation3], 0
    %s14 = scalar_lea.sflag [#allocation3], 1
    %15 = vsyncpa %s14, 0
    %16 = vsyncpa [#allocation6], 0
    %s17 = scalar_lea.sflag [#allocation6], 1
    %18 = vsyncpa %s17, 0
    %19 = vsyncpa [#allocation9], 0
    %20 = vsyncpa [#allocation12], 0
    %21 = vsyncpa [#allocation4], 0
    %s22 = scalar_lea.sflag [#allocation4], 1
    %23 = vsyncpa %s22, 0
    %24 = vsyncpa [#allocation15], 0
    %s25 = scalar_lea.sflag [#allocation15], 1
    %26 = vsyncpa %s25, 0
    loop: start=0, step=1, limit=4
    $region2: #{tpu_custom_call.1} parent=1 // loop_pre_header
      _
    $region3: #{tpu_custom_call.1} parent=1 // loop_header
      %s28 = sphi 0, %s32
      %p29 = scmp.ge.s32.totalorder %s28, 4
      %s35 = sphi 0, %s47
      %s36 = sphi 0, %s43
      %s37 = sphi 0, %s35
      %s38 = sphi 0, %s36
      %s39 = sphi 0, %s37
      %s40 = sphi 0, %s38
      %s52 = sphi 0, %s54
      %s55 = sphi 0, %s52
      %s56 = sphi 0, %s55
      %s72 = sphi 0, %s56
      %s78 = sphi 0, %s80
      %s81 = sphi 0, %s78
      %s82 = sphi 0, %s81
      %s98 = sphi 0, %s82
      %s104 = sphi 0, %s106
      %s107 = sphi 0, %s104
      %s108 = sphi 0, %s107
      %s124 = sphi 0, %s108
      %s128 = sphi 0, %s128
      %s130 = sphi 0, %s128
      %s131 = sphi 0, %s130
      %s145 = sphi 0, %s131
      %s149 = sphi 0, %s149
      %s151 = sphi 0, %s149
      %s152 = sphi 0, %s151
      %s166 = sphi 0, %s152
      %s170 = sphi 0, %s170
      %s172 = sphi 0, %s170
      %s173 = sphi 0, %s172
      %s187 = sphi 0, %s173
      %s195 = sphi 0, %s197
      %s198 = sphi 0, %s195
      %s199 = sphi 0, %s198
      %s215 = sphi 0, %s199
      %s223 = sphi 0, %s225
      %s226 = sphi 0, %s223
      %s227 = sphi 0, %s226
      %s243 = sphi 0, %s227
    $region4: #{tpu_custom_call.1} parent=1 // loop_header_branch
      %31 = sbr.rel (%p29) target = $region8
    $region5: #{tpu_custom_call.1} parent=1 // loop_body
      %s33 = ssub.s32 %s28, 1
      %s34 = ssub.s32 %s28, 2
      %s41 = sadd.s32 1, %s36
      %p42 = scmp.ge.s32.totalorder %s41, 1
      %s43 = scalar_select %p42, 0, %s41
      %s44 = sadd.s32 1, %s35
      %s45 = scalar_select %p42, %s44, %s35
      %p46 = scmp.ge.s32.totalorder %s45, 2
      %s47 = scalar_select %p46, 0, %s45
      %s48 = ssub.s32 %s35, %s47
      %s49 = ssub.s32 %s36, %s43
      %s50 = sor.u32 %s48, %s49
      %p51 = scmp.eq.s32.totalorder %s50, 0
      %s53 = sadd.s32 %s52, 1
      %s54 = scalar_select %p51, %s52, %s53
      %p57 = pneg %p51
      %p58 = scmp.eq.s32.totalorder %s28, 1
      %p59 = por %p57, %p58
      %p60 = scmp.ne.s32.totalorder %s52, %s55
      %p61 = scmp.eq.s32.totalorder %s28, 0
      %p62 = por %p60, %p61
      %p63 = scmp.ne.s32.totalorder %s52, %s55
      %p64 = scmp.eq.s32.totalorder %s33, 1
      %p65 = por %p63, %p64
      %p66 = scmp.ne.s32.totalorder %s55, %s56
      %p67 = scmp.eq.s32.totalorder %s33, 0
      %p68 = por %p66, %p67
      %p69 = scmp.ne.s32.totalorder %s55, %s56
      %p70 = scmp.eq.s32.totalorder %s34, 1
      %p71 = por %p69, %p70
      %p73 = scmp.ne.s32.totalorder %s56, %s72
      %p74 = scmp.eq.s32.totalorder %s34, 0
      %p75 = por %p73, %p74
      %s76 = ssub.s32 %s35, %s47
      %p77 = scmp.eq.s32.totalorder %s76, 0
      %s79 = sadd.s32 %s78, 1
      %s80 = scalar_select %p77, %s78, %s79
      %p83 = pneg %p77
      %p84 = scmp.eq.s32.totalorder %s28, 1
      %p85 = por %p83, %p84
      %p86 = scmp.ne.s32.totalorder %s78, %s81
      %p87 = scmp.eq.s32.totalorder %s28, 0
      %p88 = por %p86, %p87
      %p89 = scmp.ne.s32.totalorder %s78, %s81
      %p90 = scmp.eq.s32.totalorder %s33, 1
      %p91 = por %p89, %p90
      %p92 = scmp.ne.s32.totalorder %s81, %s82
      %p93 = scmp.eq.s32.totalorder %s33, 0
      %p94 = por %p92, %p93
      %p95 = scmp.ne.s32.totalorder %s81, %s82
      %p96 = scmp.eq.s32.totalorder %s34, 1
      %p97 = por %p95, %p96
      %p99 = scmp.ne.s32.totalorder %s82, %s98
      %p100 = scmp.eq.s32.totalorder %s34, 0
      %p101 = por %p99, %p100
      %s102 = ssub.s32 %s35, %s47
      %p103 = scmp.eq.s32.totalorder %s102, 0
      %s105 = sadd.s32 %s104, 1
      %s106 = scalar_select %p103, %s104, %s105
      %p109 = pneg %p103
      %p110 = scmp.eq.s32.totalorder %s28, 1
      %p111 = por %p109, %p110
      %p112 = scmp.ne.s32.totalorder %s104, %s107
      %p113 = scmp.eq.s32.totalorder %s28, 0
      %p114 = por %p112, %p113
      %p115 = scmp.ne.s32.totalorder %s104, %s107
      %p116 = scmp.eq.s32.totalorder %s33, 1
      %p117 = por %p115, %p116
      %p118 = scmp.ne.s32.totalorder %s107, %s108
      %p119 = scmp.eq.s32.totalorder %s33, 0
      %p120 = por %p118, %p119
      %p121 = scmp.ne.s32.totalorder %s107, %s108
      %p122 = scmp.eq.s32.totalorder %s34, 1
      %p123 = por %p121, %p122
      %p125 = scmp.ne.s32.totalorder %s108, %s124
      %p126 = scmp.eq.s32.totalorder %s34, 0
      %p127 = por %p125, %p126
      %s129 = sadd.s32 %s128, 1
      %p132 = scmp.eq.s32.totalorder %s28, 1
      %p133 = scmp.ne.s32.totalorder %s128, %s130
      %p134 = scmp.eq.s32.totalorder %s28, 0
      %p135 = por %p133, %p134
      %p136 = scmp.ne.s32.totalorder %s128, %s130
      %p137 = scmp.eq.s32.totalorder %s33, 1
      %p138 = por %p136, %p137
      %p139 = scmp.ne.s32.totalorder %s130, %s131
      %p140 = scmp.eq.s32.totalorder %s33, 0
      %p141 = por %p139, %p140
      %p142 = scmp.ne.s32.totalorder %s130, %s131
      %p143 = scmp.eq.s32.totalorder %s34, 1
      %p144 = por %p142, %p143
      %p146 = scmp.ne.s32.totalorder %s131, %s145
      %p147 = scmp.eq.s32.totalorder %s34, 0
      %p148 = por %p146, %p147
      %s150 = sadd.s32 %s149, 1
      %p153 = scmp.eq.s32.totalorder %s28, 1
      %p154 = scmp.ne.s32.totalorder %s149, %s151
      %p155 = scmp.eq.s32.totalorder %s28, 0
      %p156 = por %p154, %p155
      %p157 = scmp.ne.s32.totalorder %s149, %s151
      %p158 = scmp.eq.s32.totalorder %s33, 1
      %p159 = por %p157, %p158
      %p160 = scmp.ne.s32.totalorder %s151, %s152
      %p161 = scmp.eq.s32.totalorder %s33, 0
      %p162 = por %p160, %p161
      %p163 = scmp.ne.s32.totalorder %s151, %s152
      %p164 = scmp.eq.s32.totalorder %s34, 1
      %p165 = por %p163, %p164
      %p167 = scmp.ne.s32.totalorder %s152, %s166
      %p168 = scmp.eq.s32.totalorder %s34, 0
      %p169 = por %p167, %p168
      %s171 = sadd.s32 %s170, 1
      %p174 = scmp.eq.s32.totalorder %s28, 1
      %p175 = scmp.ne.s32.totalorder %s170, %s172
      %p176 = scmp.eq.s32.totalorder %s28, 0
      %p177 = por %p175, %p176
      %p178 = scmp.ne.s32.totalorder %s170, %s172
      %p179 = scmp.eq.s32.totalorder %s33, 1
      %p180 = por %p178, %p179
      %p181 = scmp.ne.s32.totalorder %s172, %s173
      %p182 = scmp.eq.s32.totalorder %s33, 0
      %p183 = por %p181, %p182
      %p184 = scmp.ne.s32.totalorder %s172, %s173
      %p185 = scmp.eq.s32.totalorder %s34, 1
      %p186 = por %p184, %p185
      %p188 = scmp.ne.s32.totalorder %s173, %s187
      %p189 = scmp.eq.s32.totalorder %s34, 0
      %p190 = por %p188, %p189
      %s191 = ssub.s32 %s35, %s47
      %s192 = ssub.s32 %s36, %s43
      %s193 = sor.u32 %s191, %s192
      %p194 = scmp.eq.s32.totalorder %s193, 0
      %s196 = sadd.s32 %s195, 1
      %s197 = scalar_select %p194, %s195, %s196
      %p200 = pneg %p194
      %p201 = scmp.eq.s32.totalorder %s28, 1
      %p202 = por %p200, %p201
      %p203 = scmp.ne.s32.totalorder %s195, %s198
      %p204 = scmp.eq.s32.totalorder %s28, 0
      %p205 = por %p203, %p204
      %p206 = scmp.ne.s32.totalorder %s195, %s198
      %p207 = scmp.eq.s32.totalorder %s33, 1
      %p208 = por %p206, %p207
      %p209 = scmp.ne.s32.totalorder %s198, %s199
      %p210 = scmp.eq.s32.totalorder %s33, 0
      %p211 = por %p209, %p210
      %p212 = scmp.ne.s32.totalorder %s198, %s199
      %p213 = scmp.eq.s32.totalorder %s34, 1
      %p214 = por %p212, %p213
      %p216 = scmp.ne.s32.totalorder %s199, %s215
      %p217 = scmp.eq.s32.totalorder %s34, 0
      %p218 = por %p216, %p217
      %s219 = ssub.s32 %s35, %s47
      %s220 = ssub.s32 %s36, %s43
      %s221 = sor.u32 %s219, %s220
      %p222 = scmp.eq.s32.totalorder %s221, 0
      %s224 = sadd.s32 %s223, 1
      %s225 = scalar_select %p222, %s223, %s224
      %p228 = pneg %p222
      %p229 = scmp.eq.s32.totalorder %s28, 1
      %p230 = por %p228, %p229
      %p231 = scmp.ne.s32.totalorder %s223, %s226
      %p232 = scmp.eq.s32.totalorder %s28, 0
      %p233 = por %p231, %p232
      %p234 = scmp.ne.s32.totalorder %s223, %s226
      %p235 = scmp.eq.s32.totalorder %s33, 1
      %p236 = por %p234, %p235
      %p237 = scmp.ne.s32.totalorder %s226, %s227
      %p238 = scmp.eq.s32.totalorder %s33, 0
      %p239 = por %p237, %p238
      %p240 = scmp.ne.s32.totalorder %s226, %s227
      %p241 = scmp.eq.s32.totalorder %s34, 1
      %p242 = por %p240, %p241
      %p244 = scmp.ne.s32.totalorder %s227, %s243
      %p245 = scmp.eq.s32.totalorder %s34, 0
      %p246 = por %p244, %p245
      %p247 = scmp.le.s32.totalorder 1, %s28
      %p248 = scmp.lt.s32.totalorder %s28, 3
      %p249 = pnand %p247, %p248
      %p250 = pneg %p249
      // Predicated region
      $region9: #{tpu_custom_call.1} parent=5 // pred_check
        _
      $region10: #{tpu_custom_call.1} parent=5 // pred_check_branch
        %252 = sbr.rel (%p249) target = $region12
      $region11: #{tpu_custom_call.1} parent=5 // pred_region
        %s253 = ssub.s32 %s28, 1
        // Predicated region
        $region13: #{tpu_custom_call.1} parent=11 // pred_check
          %p254 = pneg %p141
        $region14: #{tpu_custom_call.1} parent=11 // pred_check_branch
          %256 = sbr.rel (%p254) target = $region16
        $region15: #{tpu_custom_call.1} parent=11 // pred_region
          %258 = vsyncadd [#allocation9], 0
          %s259 = sshll.u32 %s3, 4
          %s260 = int_to_ptr.hbm [resolvable:$true] %s259
          %s261 = sshll.u32 [#allocation8], 4
          %s262 = int_to_ptr.vmem [resolvable:$true] %s261
          %267 = dma.hbm_to_vmem [thread:$0]  %s260, 512, %s262, [#allocation9], 128, 128, 8
        $region16: #{tpu_custom_call.1} parent=11 // pred_fallthru
          _
        // Predicated region
        $region17: #{tpu_custom_call.1} parent=11 // pred_check
          %p268 = pneg %p162
        $region18: #{tpu_custom_call.1} parent=11 // pred_check_branch
          %270 = sbr.rel (%p268) target = $region20
        $region19: #{tpu_custom_call.1} parent=11 // pred_region
          %272 = vsyncadd [#allocation9], 0
          %s273 = sshll.u32 %s4, 4
          %s274 = int_to_ptr.hbm [resolvable:$true] %s273
          %s275 = sshll.u32 [#allocation10], 4
          %s276 = int_to_ptr.vmem [resolvable:$true] %s275
          %281 = dma.hbm_to_vmem [thread:$0]  %s274, 512, %s276, [#allocation9], 128, 128, 8
        $region20: #{tpu_custom_call.1} parent=11 // pred_fallthru
          _
        // Predicated region
        $region21: #{tpu_custom_call.1} parent=11 // pred_check
          %p282 = pneg %p183
        $region22: #{tpu_custom_call.1} parent=11 // pred_check_branch
          %284 = sbr.rel (%p282) target = $region24
        $region23: #{tpu_custom_call.1} parent=11 // pred_region
          %286 = vsyncadd [#allocation12], 0
          %s287 = sshll.u32 %s5, 4
          %s288 = int_to_ptr.hbm [resolvable:$true] %s287
          %s289 = sshll.u32 [#allocation11], 4
          %s290 = int_to_ptr.vmem [resolvable:$true] %s289
          %295 = dma.hbm_to_vmem [thread:$0]  %s288, 512, %s290, [#allocation12], 128, 128, 8
        $region24: #{tpu_custom_call.1} parent=11 // pred_fallthru
          _
      $region12: #{tpu_custom_call.1} parent=5 // pred_fallthru
        _
      %p296 = scmp.lt.s32.totalorder %s28, 2
      // Predicated region
      $region25: #{tpu_custom_call.1} parent=5 // pred_check
        %p297 = pneg %p296
      $region26: #{tpu_custom_call.1} parent=5 // pred_check_branch
        %299 = sbr.rel (%p297) target = $region28
      $region27: #{tpu_custom_call.1} parent=5 // pred_region
        // Predicated region
        $region29: #{tpu_custom_call.1} parent=27 // pred_check
          %p300 = pneg %p62
        $region30: #{tpu_custom_call.1} parent=27 // pred_check_branch
          %302 = sbr.rel (%p300) target = $region32
        $region31: #{tpu_custom_call.1} parent=27 // pred_region
          %s303 = sand.u32 %s52, 1
          %s304 = scalar_lea.sflag [#allocation3], %s303
          %s305 = sand.u32 %s52, 1
          %s306 = smul.addr %s305, 8
          %s307 = scalar_lea.vmem [#allocation2], %s306
          %309 = vsyncadd %s304, 0
          %s310 = sadd.s32 %s36, %s35
          %s311 = smul.addr %s310, 8
          %s312 = scalar_lea.hbm %s0, %s311
          %s314 = sshll.u32 %s312, 4
          %s315 = int_to_ptr.hbm [resolvable:$true] %s314
          %s316 = sshll.u32 %s307, 4
          %s317 = int_to_ptr.vmem [resolvable:$true] %s316
          %319 = dma.hbm_to_vmem [thread:$0]  %s315, 128, %s317, %s304
        $region32: #{tpu_custom_call.1} parent=27 // pred_fallthru
          _
        // Predicated region
        $region33: #{tpu_custom_call.1} parent=27 // pred_check
          %p320 = pneg %p88
        $region34: #{tpu_custom_call.1} parent=27 // pred_check_branch
          %322 = sbr.rel (%p320) target = $region36
        $region35: #{tpu_custom_call.1} parent=27 // pred_region
          %s323 = sand.u32 %s28, 1
          %s324 = scalar_lea.sflag [#allocation6], %s323
          %s325 = sand.u32 %s78, 1
          %s326 = smul.addr %s325, 8
          %s327 = scalar_lea.vmem [#allocation5], %s326
          %329 = vsyncadd %s324, 0
          %s330 = smul.addr %s35, 8
          %s331 = scalar_lea.hbm %s1, %s330
          %s333 = sshll.u32 %s331, 4
          %s334 = int_to_ptr.hbm [resolvable:$true] %s333
          %s335 = sshll.u32 %s327, 4
          %s336 = int_to_ptr.vmem [resolvable:$true] %s335
          %338 = dma.hbm_to_vmem [thread:$0]  %s334, 128, %s336, %s324
        $region36: #{tpu_custom_call.1} parent=27 // pred_fallthru
          _
        // Predicated region
        $region37: #{tpu_custom_call.1} parent=27 // pred_check
          %p339 = pneg %p114
        $region38: #{tpu_custom_call.1} parent=27 // pred_check_branch
          %341 = sbr.rel (%p339) target = $region40
        $region39: #{tpu_custom_call.1} parent=27 // pred_region
          %s342 = sand.u32 %s28, 1
          %s343 = scalar_lea.sflag [#allocation6], %s342
          %s344 = sand.u32 %s104, 1
          %s345 = smul.addr %s344, 8
          %s346 = scalar_lea.vmem [#allocation7], %s345
          %348 = vsyncadd %s343, 0
          %s349 = smul.addr %s35, 8
          %s350 = scalar_lea.hbm %s2, %s349
          %s352 = sshll.u32 %s350, 4
          %s353 = int_to_ptr.hbm [resolvable:$true] %s352
          %s354 = sshll.u32 %s346, 4
          %s355 = int_to_ptr.vmem [resolvable:$true] %s354
          %357 = dma.hbm_to_vmem [thread:$0]  %s353, 128, %s355, %s343
        $region40: #{tpu_custom_call.1} parent=27 // pred_fallthru
          _
      $region28: #{tpu_custom_call.1} parent=5 // pred_fallthru
        _
      %p358 = scmp.le.s32.totalorder 1, %s28
      %p359 = scmp.lt.s32.totalorder %s28, 3
      %p360 = pnand %p358, %p359
      %p361 = pneg %p360
      // Predicated region
      $region41: #{tpu_custom_call.1} parent=5 // pred_check
        _
      $region42: #{tpu_custom_call.1} parent=5 // pred_check_branch
        %363 = sbr.rel (%p360) target = $region44
      $region43: #{tpu_custom_call.1} parent=5 // pred_region
        %s364 = ssub.s32 %s28, 1
        %s365 = sand.u32 %s55, 1
        %s366 = scalar_lea.sflag [#allocation3], %s365
        %s367 = sand.u32 %s55, 1
        %s368 = smul.addr %s367, 8
        %s369 = scalar_lea.vmem [#allocation2], %s368
        // Predicated region
        $region45: #{tpu_custom_call.1} parent=43 // pred_check
          %p370 = pneg %p68
        $region46: #{tpu_custom_call.1} parent=43 // pred_check_branch
          %372 = sbr.rel (%p370) target = $region48
        $region47: #{tpu_custom_call.1} parent=43 // pred_region
          %374 = dma.done %s366, 128
        $region48: #{tpu_custom_call.1} parent=43 // pred_fallthru
          _
        %s375 = sand.u32 %s33, 1
        %s376 = scalar_lea.sflag [#allocation6], %s375
        %s377 = sand.u32 %s81, 1
        %s378 = smul.addr %s377, 8
        %s379 = scalar_lea.vmem [#allocation5], %s378
        // Predicated region
        $region49: #{tpu_custom_call.1} parent=43 // pred_check
          %p380 = pneg %p94
        $region50: #{tpu_custom_call.1} parent=43 // pred_check_branch
          %382 = sbr.rel (%p380) target = $region52
        $region51: #{tpu_custom_call.1} parent=43 // pred_region
          %384 = dma.done %s376, 128
        $region52: #{tpu_custom_call.1} parent=43 // pred_fallthru
          _
        %s385 = sand.u32 %s33, 1
        %s386 = scalar_lea.sflag [#allocation6], %s385
        %s387 = sand.u32 %s107, 1
        %s388 = smul.addr %s387, 8
        %s389 = scalar_lea.vmem [#allocation7], %s388
        // Predicated region
        $region53: #{tpu_custom_call.1} parent=43 // pred_check
          %p390 = pneg %p120
        $region54: #{tpu_custom_call.1} parent=43 // pred_check_branch
          %392 = sbr.rel (%p390) target = $region56
        $region55: #{tpu_custom_call.1} parent=43 // pred_region
          %394 = dma.done %s386, 128
        $region56: #{tpu_custom_call.1} parent=43 // pred_fallthru
          _
        // Predicated region
        $region57: #{tpu_custom_call.1} parent=43 // pred_check
          %p395 = pneg %p141
        $region58: #{tpu_custom_call.1} parent=43 // pred_check_branch
          %397 = sbr.rel (%p395) target = $region60
        $region59: #{tpu_custom_call.1} parent=43 // pred_region
          %399 = dma.done [#allocation9], 512
        $region60: #{tpu_custom_call.1} parent=43 // pred_fallthru
          _
        // Predicated region
        $region61: #{tpu_custom_call.1} parent=43 // pred_check
          %p400 = pneg %p162
        $region62: #{tpu_custom_call.1} parent=43 // pred_check_branch
          %402 = sbr.rel (%p400) target = $region64
        $region63: #{tpu_custom_call.1} parent=43 // pred_region
          %404 = dma.done [#allocation9], 512
        $region64: #{tpu_custom_call.1} parent=43 // pred_fallthru
          _
        // Predicated region
        $region65: #{tpu_custom_call.1} parent=43 // pred_check
          %p405 = pneg %p183
        $region66: #{tpu_custom_call.1} parent=43 // pred_check_branch
          %407 = sbr.rel (%p405) target = $region68
        $region67: #{tpu_custom_call.1} parent=43 // pred_region
          %409 = dma.done [#allocation12], 512
        $region68: #{tpu_custom_call.1} parent=43 // pred_fallthru
          _
        %s410 = sand.u32 %s55, 1
        %s411 = scalar_lea.sflag [#allocation3], %s410
        %s412 = sand.u32 %s55, 1
        %s413 = smul.addr %s412, 8
        %s414 = scalar_lea.vmem [#allocation2], %s413
        %p415 = pneg %p68
        %p416 = pneg %p65
        %s417 = sand.u32 %s33, 1
        %s418 = scalar_lea.sflag [#allocation6], %s417
        %s419 = sand.u32 %s81, 1
        %s420 = smul.addr %s419, 8
        %s421 = scalar_lea.vmem [#allocation5], %s420
        %p422 = pneg %p94
        %p423 = pneg %p91
        %s424 = sand.u32 %s33, 1
        %s425 = scalar_lea.sflag [#allocation6], %s424
        %s426 = sand.u32 %s107, 1
        %s427 = smul.addr %s426, 8
        %s428 = scalar_lea.vmem [#allocation7], %s427
        %p429 = pneg %p120
        %p430 = pneg %p117
        %p431 = pneg %p141
        %p432 = pneg %p138
        %p433 = pneg %p162
        %p434 = pneg %p159
        %p435 = pneg %p183
        %p436 = pneg %p180
        %p437 = pneg %p211
        %p438 = pneg %p208
        %s439 = sand.u32 %s198, 1
        %s440 = scalar_lea.sflag [#allocation4], %s439
        %s441 = sand.u32 %s198, 1
        %s442 = smul.addr %s441, 8
        %s443 = scalar_lea.vmem [#allocation13], %s442
        %p444 = pneg %p239
        %p445 = pneg %p236
        %s446 = sand.u32 %s226, 1
        %s447 = scalar_lea.sflag [#allocation15], %s446
        %s448 = sand.u32 %s226, 1
        %s449 = smul.addr %s448, 32
        %s450 = scalar_lea.vmem [#allocation14], %s449
        %v451 = vld [vmem:[%s369] sm:$0xff]
        %v452 = vld [vmem:[%s379] sm:$0xff]
        %v453 = vld [vmem:[%s389] sm:$0xff]
        %v454 = vld [vmem:[#allocation8] sm:$0xff]
        %v455 = vld [vmem:[#allocation8 + $0x8] sm:$0xff]
        %v456 = vld [vmem:[#allocation8 + $0x10] sm:$0xff]
        %v457 = vld [vmem:[#allocation8 + $0x18] sm:$0xff]
        %v458 = vld [vmem:[#allocation10] sm:$0xff]
        %v459 = vld [vmem:[#allocation10 + $0x8] sm:$0xff]
        %v460 = vld [vmem:[#allocation10 + $0x10] sm:$0xff]
        %v461 = vld [vmem:[#allocation10 + $0x18] sm:$0xff]
        %v462 = vld [vmem:[#allocation11] sm:$0xff]
        %v463 = vld [vmem:[#allocation11 + $0x8] sm:$0xff]
        %v464 = vld [vmem:[#allocation11 + $0x10] sm:$0xff]
        %v465 = vld [vmem:[#allocation11 + $0x18] sm:$0xff]
        %vm466 = vcmask 261120
        %v468 = vsel %vm466, %v451, 0
        %470 = vmatpush.msra.mxu0 0.0
        %471 = vmatpush.msra.mxu0 0.0
        %472 = vmatpush.msra.mxu0 0.0
        %473 = vmatpush.msra.mxu0 0.0
        %474 = vmatpush.msra.mxu0 0.0
        %475 = vmatpush.msra.mxu0 0.0
        %476 = vmatpush.msra.mxu0 0.0
        %477 = vmatpush.msra.mxu0 0.0
        %478 = vmatpush.msra.mxu0 0.0
        %479 = vmatpush.msra.mxu0 0.0
        %480 = vmatpush.msra.mxu0 0.0
        %481 = vmatpush.msra.mxu0 0.0
        %482 = vmatpush.msra.mxu0 %v457
        %483 = vmatpush.msra.mxu0 %v456
        %484 = vmatpush.msra.mxu0 %v455
        %485 = vmatpush.msra.mxu0 %v454
        %486 = vmatmul.f32.gmra.mxu0 %v468
        %v487 = vpop.f32.mrf.mxu0
        %v488 = vadd.f32 0.0, %v487
        %489 = vdwg.mxu0
        %v490 = vmul.f32 %v488, 0.25
        %v492 = vsel %vm466, %v452, 0
        %494 = vmatpush.msra.mxu0 0.0
        %495 = vmatpush.msra.mxu0 0.0
        %496 = vmatpush.msra.mxu0 0.0
        %497 = vmatpush.msra.mxu0 0.0
        %498 = vmatpush.msra.mxu0 0.0
        %499 = vmatpush.msra.mxu0 0.0
        %500 = vmatpush.msra.mxu0 0.0
        %501 = vmatpush.msra.mxu0 0.0
        %502 = vmatpush.msra.mxu0 0.0
        %503 = vmatpush.msra.mxu0 0.0
        %504 = vmatpush.msra.mxu0 0.0
        %505 = vmatpush.msra.mxu0 0.0
        %506 = vmatpush.msra.mxu0 %v461
        %507 = vmatpush.msra.mxu0 %v460
        %508 = vmatpush.msra.mxu0 %v459
        %509 = vmatpush.msra.mxu0 %v458
        %510 = vmatmul.f32.gmra.mxu0 %v492
        %v511 = vpop.f32.mrf.mxu0
        %v512 = vadd.f32 0.0, %v511
        %513 = vdwg.mxu0
        %v515 = vsel %vm466, %v453, 0
        %517 = vmatpush.msra.mxu0 0.0
        %518 = vmatpush.msra.mxu0 0.0
        %519 = vmatpush.msra.mxu0 0.0
        %520 = vmatpush.msra.mxu0 0.0
        %521 = vmatpush.msra.mxu0 0.0
        %522 = vmatpush.msra.mxu0 0.0
        %523 = vmatpush.msra.mxu0 0.0
        %524 = vmatpush.msra.mxu0 0.0
        %525 = vmatpush.msra.mxu0 0.0
        %526 = vmatpush.msra.mxu0 0.0
        %527 = vmatpush.msra.mxu0 0.0
        %528 = vmatpush.msra.mxu0 0.0
        %529 = vmatpush.msra.mxu0 %v465
        %530 = vmatpush.msra.mxu0 %v464
        %531 = vmatpush.msra.mxu0 %v463
        %532 = vmatpush.msra.mxu0 %v462
        %533 = vmatmul.f32.gmra.mxu0 %v515
        %v534 = vpop.f32.mrf.mxu0
        %v535 = vadd.f32 0.0, %v534
        %536 = vdwg.mxu0
        %vm537 = vcmask 130048
        %v539 = vsel %vm537, %v490, 0
        %v542 = vsel %vm537, %v512, 0
        %544 = vmatpush.xpose.msra.mxu0 0.0
        %545 = vmatpush.xpose.msra.mxu0 0.0
        %546 = vmatpush.xpose.msra.mxu0 0.0
        %547 = vmatpush.xpose.msra.mxu0 0.0
        %548 = vmatpush.xpose.msra.mxu0 0.0
        %549 = vmatpush.xpose.msra.mxu0 0.0
        %550 = vmatpush.xpose.msra.mxu0 0.0
        %551 = vmatpush.xpose.msra.mxu0 0.0
        %552 = vmatpush.xpose.msra.mxu0 0.0
        %553 = vmatpush.xpose.msra.mxu0 0.0
        %554 = vmatpush.xpose.msra.mxu0 0.0
        %555 = vmatpush.xpose.msra.mxu0 0.0
        %556 = vmatpush.xpose.msra.mxu0 0.0
        %557 = vmatpush.xpose.msra.mxu0 0.0
        %558 = vmatpush.xpose.msra.mxu0 0.0
        %559 = vmatpush.xpose.msra.mxu0 %v542
        %560 = vmatmul.f32.gmra.mxu0 %v539
        %v561 = vpop.f32.mrf.mxu0
        %v562 = vadd.f32 0.0, %v561
        %563 = vdwg.mxu0
        %vm564 = vcmask 64512
        %v565 = vsel %vm564, %v562, -inf
        %566 = vmax.xlane.f32.xlu0 %v565
        %v567 = vpop.xlane.xlu0 %566
        %v568 = vsub.f32 %v562, %v567
        %v569 = vmul.f32 %v568, 1.442695
        %v570 = vpow.pop %v569
        %v571 = vsel %vm564, %v570, 0.0
        %572 = vadd.xlane.f32.xlu0 %v571
        %v573 = vpop.xlane.xlu0 %572
        %v574 = vrcp.pop %v573
        %v575 = vmul.f32 %v573, %v574
        %v576 = vsub.f32 1.0, %v575
        %v577 = vmul.f32 %v574, %v576
        %v578 = vadd.f32 %v574, %v577
        %vm579 = vweird.f32 %v573
        %vm580 = vweird.f32 %v574
        %vm581 = vmor %vm579, %vm580
        %v582 = vsel %vm581, %v574, %v578
        %v583 = vand.u32 2147483647, %v573
        %vm584 = vcmp.eq.f32.partialorder %v583, 8.507059e+37
        %v585 = vand.u32 %v573, 2147483648
        %v586 = vor.u32 1.1754944e-38, %v585
        %v587 = vsel %vm584, %v586, %v582
        %v588 = vmul.f32 %v570, %v587
        %589 = vst.msk [vmem:[%s450] sm:$0xff] %vm564, %v588
        %v591 = vsel %vm564, %v588, 0
        %593 = vmatpush.msra.mxu0 0.0
        %594 = vmatpush.msra.mxu0 0.0
        %595 = vmatpush.msra.mxu0 0.0
        %596 = vmatpush.msra.mxu0 0.0
        %597 = vmatpush.msra.mxu0 0.0
        %598 = vmatpush.msra.mxu0 0.0
        %599 = vmatpush.msra.mxu0 0.0
        %600 = vmatpush.msra.mxu0 0.0
        %601 = vmatpush.msra.mxu0 0.0
        %602 = vmatpush.msra.mxu0 0.0
        %603 = vmatpush.msra.mxu0 0.0
        %604 = vmatpush.msra.mxu0 0.0
        %605 = vmatpush.msra.mxu0 0.0
        %606 = vmatpush.msra.mxu0 0.0
        %607 = vmatpush.msra.mxu0 0.0
        %608 = vmatpush.msra.mxu0 %v535
        %609 = vmatmul.f32.gmra.mxu0 %v591
        %v610 = vpop.f32.mrf.mxu0
        %v611 = vadd.f32 0.0, %v610
        %612 = vdwg.mxu0
        %613 = vrot.lane.b32.xlu0 %v490, 112
        %v614 = vpop.permute.xlu0 %613
        %615 = vrot.lane.b32.xlu0 %v512, 112
        %v616 = vpop.permute.xlu0 %615
        %v617 = vsel %vm537, %v614, 0
        %v619 = vsel %vm537, %v616, 0
        %621 = vmatpush.xpose.msra.mxu0 0.0
        %622 = vmatpush.xpose.msra.mxu0 0.0
        %623 = vmatpush.xpose.msra.mxu0 0.0
        %624 = vmatpush.xpose.msra.mxu0 0.0
        %625 = vmatpush.xpose.msra.mxu0 0.0
        %626 = vmatpush.xpose.msra.mxu0 0.0
        %627 = vmatpush.xpose.msra.mxu0 0.0
        %628 = vmatpush.xpose.msra.mxu0 0.0
        %629 = vmatpush.xpose.msra.mxu0 0.0
        %630 = vmatpush.xpose.msra.mxu0 0.0
        %631 = vmatpush.xpose.msra.mxu0 0.0
        %632 = vmatpush.xpose.msra.mxu0 0.0
        %633 = vmatpush.xpose.msra.mxu0 0.0
        %634 = vmatpush.xpose.msra.mxu0 0.0
        %635 = vmatpush.xpose.msra.mxu0 0.0
        %636 = vmatpush.xpose.msra.mxu0 %v619
        %637 = vmatmul.f32.gmra.mxu0 %v617
        %v638 = vpop.f32.mrf.mxu0
        %v639 = vadd.f32 0.0, %v638
        %640 = vdwg.mxu0
        %v641 = vsel %vm564, %v639, -inf
        %642 = vmax.xlane.f32.xlu0 %v641
        %v643 = vpop.xlane.xlu0 %642
        %v644 = vsub.f32 %v639, %v643
        %v645 = vmul.f32 %v644, 1.442695
        %v646 = vpow.pop %v645
        %v647 = vsel %vm564, %v646, 0.0
        %648 = vadd.xlane.f32.xlu0 %v647
        %v649 = vpop.xlane.xlu0 %648
        %v650 = vrcp.pop %v649
        %v651 = vmul.f32 %v649, %v650
        %v652 = vsub.f32 1.0, %v651
        %v653 = vmul.f32 %v650, %v652
        %v654 = vadd.f32 %v650, %v653
        %vm655 = vweird.f32 %v649
        %vm656 = vweird.f32 %v650
        %vm657 = vmor %vm655, %vm656
        %v658 = vsel %vm657, %v650, %v654
        %v659 = vand.u32 2147483647, %v649
        %vm660 = vcmp.eq.f32.partialorder %v659, 8.507059e+37
        %v661 = vand.u32 %v649, 2147483648
        %v662 = vor.u32 1.1754944e-38, %v661
        %v663 = vsel %vm660, %v662, %v658
        %v664 = vmul.f32 %v646, %v663
        %s665 = scalar_lea.vmem %s450, 8 [#allocation14]
        %666 = vst.msk [vmem:[%s665] sm:$0xff] %vm564, %v664
        %668 = vrot.lane.b32.xlu0 %v535, 112
        %v669 = vpop.permute.xlu0 %668
        %v672 = vsel %vm564, %v664, 0
        %674 = vmatpush.msra.mxu0 0.0
        %675 = vmatpush.msra.mxu0 0.0
        %676 = vmatpush.msra.mxu0 0.0
        %677 = vmatpush.msra.mxu0 0.0
        %678 = vmatpush.msra.mxu0 0.0
        %679 = vmatpush.msra.mxu0 0.0
        %680 = vmatpush.msra.mxu0 0.0
        %681 = vmatpush.msra.mxu0 0.0
        %682 = vmatpush.msra.mxu0 0.0
        %683 = vmatpush.msra.mxu0 0.0
        %684 = vmatpush.msra.mxu0 0.0
        %685 = vmatpush.msra.mxu0 0.0
        %686 = vmatpush.msra.mxu0 0.0
        %687 = vmatpush.msra.mxu0 0.0
        %688 = vmatpush.msra.mxu0 0.0
        %689 = vmatpush.msra.mxu0 %v669
        %690 = vmatmul.f32.gmra.mxu0 %v672
        %v691 = vpop.f32.mrf.mxu0
        %v692 = vadd.f32 0.0, %v691
        %693 = vdwg.mxu0
        %694 = vrot.lane.b32.xlu0 %v490, 96
        %v695 = vpop.permute.xlu0 %694
        %696 = vrot.lane.b32.xlu0 %v512, 96
        %v697 = vpop.permute.xlu0 %696
        %v698 = vsel %vm537, %v695, 0
        %v700 = vsel %vm537, %v697, 0
        %702 = vmatpush.xpose.msra.mxu0 0.0
        %703 = vmatpush.xpose.msra.mxu0 0.0
        %704 = vmatpush.xpose.msra.mxu0 0.0
        %705 = vmatpush.xpose.msra.mxu0 0.0
        %706 = vmatpush.xpose.msra.mxu0 0.0
        %707 = vmatpush.xpose.msra.mxu0 0.0
        %708 = vmatpush.xpose.msra.mxu0 0.0
        %709 = vmatpush.xpose.msra.mxu0 0.0
        %710 = vmatpush.xpose.msra.mxu0 0.0
        %711 = vmatpush.xpose.msra.mxu0 0.0
        %712 = vmatpush.xpose.msra.mxu0 0.0
        %713 = vmatpush.xpose.msra.mxu0 0.0
        %714 = vmatpush.xpose.msra.mxu0 0.0
        %715 = vmatpush.xpose.msra.mxu0 0.0
        %716 = vmatpush.xpose.msra.mxu0 0.0
        %717 = vmatpush.xpose.msra.mxu0 %v700
        %718 = vmatmul.f32.gmra.mxu0 %v698
        %v719 = vpop.f32.mrf.mxu0
        %v720 = vadd.f32 0.0, %v719
        %721 = vdwg.mxu0
        %v722 = vsel %vm564, %v720, -inf
        %723 = vmax.xlane.f32.xlu0 %v722
        %v724 = vpop.xlane.xlu0 %723
        %v725 = vsub.f32 %v720, %v724
        %v726 = vmul.f32 %v725, 1.442695
        %v727 = vpow.pop %v726
        %v728 = vsel %vm564, %v727, 0.0
        %729 = vadd.xlane.f32.xlu0 %v728
        %v730 = vpop.xlane.xlu0 %729
        %v731 = vrcp.pop %v730
        %v732 = vmul.f32 %v730, %v731
        %v733 = vsub.f32 1.0, %v732
        %v734 = vmul.f32 %v731, %v733
        %v735 = vadd.f32 %v731, %v734
        %vm736 = vweird.f32 %v730
        %vm737 = vweird.f32 %v731
        %vm738 = vmor %vm736, %vm737
        %v739 = vsel %vm738, %v731, %v735
        %v740 = vand.u32 2147483647, %v730
        %vm741 = vcmp.eq.f32.partialorder %v740, 8.507059e+37
        %v742 = vand.u32 %v730, 2147483648
        %v743 = vor.u32 1.1754944e-38, %v742
        %v744 = vsel %vm741, %v743, %v739
        %v745 = vmul.f32 %v727, %v744
        %s746 = scalar_lea.vmem %s450, 16 [#allocation14]
        %747 = vst.msk [vmem:[%s746] sm:$0xff] %vm564, %v745
        %748 = vrot.lane.b32.xlu0 %v535, 96
        %v749 = vpop.permute.xlu0 %748
        %v752 = vsel %vm564, %v745, 0
        %754 = vmatpush.msra.mxu0 0.0
        %755 = vmatpush.msra.mxu0 0.0
        %756 = vmatpush.msra.mxu0 0.0
        %757 = vmatpush.msra.mxu0 0.0
        %758 = vmatpush.msra.mxu0 0.0
        %759 = vmatpush.msra.mxu0 0.0
        %760 = vmatpush.msra.mxu0 0.0
        %761 = vmatpush.msra.mxu0 0.0
        %762 = vmatpush.msra.mxu0 0.0
        %763 = vmatpush.msra.mxu0 0.0
        %764 = vmatpush.msra.mxu0 0.0
        %765 = vmatpush.msra.mxu0 0.0
        %766 = vmatpush.msra.mxu0 0.0
        %767 = vmatpush.msra.mxu0 0.0
        %768 = vmatpush.msra.mxu0 0.0
        %769 = vmatpush.msra.mxu0 %v749
        %770 = vmatmul.f32.gmra.mxu0 %v752
        %v771 = vpop.f32.mrf.mxu0
        %v772 = vadd.f32 0.0, %v771
        %773 = vdwg.mxu0
        %774 = vrot.lane.b32.xlu0 %v490, 80
        %v775 = vpop.permute.xlu0 %774
        %776 = vrot.lane.b32.xlu0 %v512, 80
        %v777 = vpop.permute.xlu0 %776
        %v778 = vsel %vm537, %v775, 0
        %v780 = vsel %vm537, %v777, 0
        %782 = vmatpush.xpose.msra.mxu0 0.0
        %783 = vmatpush.xpose.msra.mxu0 0.0
        %784 = vmatpush.xpose.msra.mxu0 0.0
        %785 = vmatpush.xpose.msra.mxu0 0.0
        %786 = vmatpush.xpose.msra.mxu0 0.0
        %787 = vmatpush.xpose.msra.mxu0 0.0
        %788 = vmatpush.xpose.msra.mxu0 0.0
        %789 = vmatpush.xpose.msra.mxu0 0.0
        %790 = vmatpush.xpose.msra.mxu0 0.0
        %791 = vmatpush.xpose.msra.mxu0 0.0
        %792 = vmatpush.xpose.msra.mxu0 0.0
        %793 = vmatpush.xpose.msra.mxu0 0.0
        %794 = vmatpush.xpose.msra.mxu0 0.0
        %795 = vmatpush.xpose.msra.mxu0 0.0
        %796 = vmatpush.xpose.msra.mxu0 0.0
        %797 = vmatpush.xpose.msra.mxu0 %v780
        %798 = vmatmul.f32.gmra.mxu0 %v778
        %v799 = vpop.f32.mrf.mxu0
        %v800 = vadd.f32 0.0, %v799
        %801 = vdwg.mxu0
        %v802 = vsel %vm564, %v800, -inf
        %803 = vmax.xlane.f32.xlu0 %v802
        %v804 = vpop.xlane.xlu0 %803
        %v805 = vsub.f32 %v800, %v804
        %v806 = vmul.f32 %v805, 1.442695
        %v807 = vpow.pop %v806
        %v808 = vsel %vm564, %v807, 0.0
        %809 = vadd.xlane.f32.xlu0 %v808
        %v810 = vpop.xlane.xlu0 %809
        %v811 = vrcp.pop %v810
        %v812 = vmul.f32 %v810, %v811
        %v813 = vsub.f32 1.0, %v812
        %v814 = vmul.f32 %v811, %v813
        %v815 = vadd.f32 %v811, %v814
        %vm816 = vweird.f32 %v810
        %vm817 = vweird.f32 %v811
        %vm818 = vmor %vm816, %vm817
        %v819 = vsel %vm818, %v811, %v815
        %v820 = vand.u32 2147483647, %v810
        %vm821 = vcmp.eq.f32.partialorder %v820, 8.507059e+37
        %v822 = vand.u32 %v810, 2147483648
        %v823 = vor.u32 1.1754944e-38, %v822
        %v824 = vsel %vm821, %v823, %v819
        %v825 = vmul.f32 %v807, %v824
        %s826 = scalar_lea.vmem %s450, 24 [#allocation14]
        %827 = vst.msk [vmem:[%s826] sm:$0xff] %vm564, %v825
        %828 = vrot.lane.b32.xlu0 %v535, 80
        %v829 = vpop.permute.xlu0 %828
        %v832 = vsel %vm564, %v825, 0
        %834 = vmatpush.msra.mxu0 0.0
        %835 = vmatpush.msra.mxu0 0.0
        %836 = vmatpush.msra.mxu0 0.0
        %837 = vmatpush.msra.mxu0 0.0
        %838 = vmatpush.msra.mxu0 0.0
        %839 = vmatpush.msra.mxu0 0.0
        %840 = vmatpush.msra.mxu0 0.0
        %841 = vmatpush.msra.mxu0 0.0
        %842 = vmatpush.msra.mxu0 0.0
        %843 = vmatpush.msra.mxu0 0.0
        %844 = vmatpush.msra.mxu0 0.0
        %845 = vmatpush.msra.mxu0 0.0
        %846 = vmatpush.msra.mxu0 0.0
        %847 = vmatpush.msra.mxu0 0.0
        %848 = vmatpush.msra.mxu0 0.0
        %849 = vmatpush.msra.mxu0 %v829
        %850 = vmatmul.f32.gmra.mxu0 %v832
        %v851 = vpop.f32.mrf.mxu0
        %v852 = vadd.f32 0.0, %v851
        %853 = vdwg.mxu0
        %855 = vrot.lane.b32.xlu0 %v692, 16
        %v856 = vpop.permute.xlu0 %855
        %859 = vrot.lane.b32.xlu0 %v772, 32
        %v860 = vpop.permute.xlu0 %859
        %863 = vrot.lane.b32.xlu0 %v852, 48
        %v864 = vpop.permute.xlu0 %863
        %v866 = vsel %vm537, %v611, %v856
        %v867 = vsel %vm466, %v866, %v860
        %vm868 = vcmask 392192
        %v869 = vsel %vm868, %v867, %v864
        %vm870 = vcmask 523264
        %871 = vst.msk [vmem:[%s443] sm:$0xff] %vm870, %v869
        %s872 = sand.u32 %s198, 1
        %s873 = scalar_lea.sflag [#allocation4], %s872
        %s874 = sand.u32 %s198, 1
        %s875 = smul.addr %s874, 8
        %s876 = scalar_lea.vmem [#allocation13], %s875
        %s877 = sand.u32 %s226, 1
        %s878 = scalar_lea.sflag [#allocation15], %s877
        %s879 = sand.u32 %s226, 1
        %s880 = smul.addr %s879, 32
        %s881 = scalar_lea.vmem [#allocation14], %s880
        // Predicated region
        $region69: #{tpu_custom_call.1} parent=43 // pred_check
          %p882 = pneg %p208
        $region70: #{tpu_custom_call.1} parent=43 // pred_check_branch
          %884 = sbr.rel (%p882) target = $region72
        $region71: #{tpu_custom_call.1} parent=43 // pred_region
          %886 = vsyncadd %s873, 0
          %s887 = sadd.s32 %s38, %s37
          %s888 = smul.addr %s887, 8
          %s889 = scalar_lea.hbm %s6, %s888
          %s891 = sshll.u32 %s876, 4
          %s892 = int_to_ptr.vmem [resolvable:$true] %s891
          %s893 = sshll.u32 %s889, 4
          %s894 = int_to_ptr.hbm [resolvable:$true] %s893
          %896 = dma.vmem_to_hbm [thread:$0]  %s892, 128, %s894, %s873
        $region72: #{tpu_custom_call.1} parent=43 // pred_fallthru
          _
        // Predicated region
        $region73: #{tpu_custom_call.1} parent=43 // pred_check
          %p897 = pneg %p236
        $region74: #{tpu_custom_call.1} parent=43 // pred_check_branch
          %899 = sbr.rel (%p897) target = $region76
        $region75: #{tpu_custom_call.1} parent=43 // pred_region
          %901 = vsyncadd %s878, 0
          %s902 = sadd.s32 %s38, %s37
          %s903 = smul.addr %s902, 8
          %s904 = scalar_lea.hbm %s7, %s903
          %s905 = sshll.u32 %s881, 4
          %s906 = int_to_ptr.vmem [resolvable:$true] %s905
          %s907 = sshll.u32 %s904, 4
          %s908 = int_to_ptr.hbm [resolvable:$true] %s907
          %913 = dma.vmem_to_hbm [thread:$0]  %s906, 512, %s908, %s878, 128, 256, 8
        $region76: #{tpu_custom_call.1} parent=43 // pred_fallthru
          _
      $region44: #{tpu_custom_call.1} parent=5 // pred_fallthru
        _
      %p914 = scmp.le.s32.totalorder 2, %s28
      // Predicated region
      $region77: #{tpu_custom_call.1} parent=5 // pred_check
        %p915 = pneg %p914
      $region78: #{tpu_custom_call.1} parent=5 // pred_check_branch
        %917 = sbr.rel (%p915) target = $region80
      $region79: #{tpu_custom_call.1} parent=5 // pred_region
        %s918 = ssub.s32 %s28, 2
        // Predicated region
        $region81: #{tpu_custom_call.1} parent=79 // pred_check
          %p919 = pneg %p214
        $region82: #{tpu_custom_call.1} parent=79 // pred_check_branch
          %921 = sbr.rel (%p919) target = $region84
        $region83: #{tpu_custom_call.1} parent=79 // pred_region
          %s922 = sand.u32 %s199, 1
          %s923 = scalar_lea.sflag [#allocation4], %s922
          %s924 = sand.u32 %s199, 1
          %s925 = smul.addr %s924, 8
          %s926 = scalar_lea.vmem [#allocation13], %s925
          %928 = dma.done %s923, 128
        $region84: #{tpu_custom_call.1} parent=79 // pred_fallthru
          _
        // Predicated region
        $region85: #{tpu_custom_call.1} parent=79 // pred_check
          %p929 = pneg %p242
        $region86: #{tpu_custom_call.1} parent=79 // pred_check_branch
          %931 = sbr.rel (%p929) target = $region88
        $region87: #{tpu_custom_call.1} parent=79 // pred_region
          %s932 = sand.u32 %s227, 1
          %s933 = scalar_lea.sflag [#allocation15], %s932
          %s934 = sand.u32 %s227, 1
          %s935 = smul.addr %s934, 32
          %s936 = scalar_lea.vmem [#allocation14], %s935
          %938 = dma.done %s933, 512
        $region88: #{tpu_custom_call.1} parent=79 // pred_fallthru
          _
      $region80: #{tpu_custom_call.1} parent=5 // pred_fallthru
        _
    $region6: #{tpu_custom_call.1} parent=1 // loop_footer
      %s32 = sadd.s32 1, %s28
    $region7: #{tpu_custom_call.1} parent=1 // loop_footer_branch
      %27 = sbr.rel target = $region3
    $region8: #{tpu_custom_call.1} parent=1 // loop_exit
      _
    %939 = vsyncpa [#allocation3], 1
    %s940 = scalar_lea.sflag [#allocation3], 1
    %941 = vsyncpa %s940, 1
    %942 = vsyncpa [#allocation6], 1
    %s943 = scalar_lea.sflag [#allocation6], 1
    %944 = vsyncpa %s943, 1
    %945 = vsyncpa [#allocation9], 1
    %946 = vsyncpa [#allocation12], 1
    %947 = vsyncpa [#allocation4], 1
    %s948 = scalar_lea.sflag [#allocation4], 1
    %949 = vsyncpa %s948, 1
    %950 = vsyncpa [#allocation15], 1
    %s951 = scalar_lea.sflag [#allocation15], 1
    %952 = vsyncpa %s951, 1

</llo_original>
